<compile_context>
chip_gen: v7x
topology: tpu7x:2x2x1
jax: 0.10.0
libtpu: 0.0.40
codegen_flags: <defaults>
</compile_context>

<pallas_src>
import functools

import jax
import jax.numpy as jnp
from jax import lax
from jax.experimental import pallas as pl
from jax.experimental.pallas import tpu as pltpu

_LANES = 128
_SUBLANES = 8
_MAX_BLOCK_ROWS = 8192   # 8192 x 128 x 4B = 4 MiB per f32 input per buffer
_SUB_ROWS = 512          # compute sub-slab rows (keeps working set in vregs)
_ROW_MULT = 32           # sublane multiple safe for f32 / bf16 / int8 inputs


def _focal_partial(x, t, *, gamma, binary_targets, valid):
    """Focal chain on an f32 (rows, 128) slab, reduced to one (8, 128) partial."""
    z = jnp.exp(-jnp.abs(x))
    # Numerically stable BCE-with-logits: max(x,0) - x*t + log(1 + exp(-|x|))
    bce = jnp.maximum(x, 0.0) - x * t + jnp.log1p(z)

    if binary_targets:
        # pt without exp(-bce): reuse z = exp(-|x|) to form sigmoid(x) with a
        # cheap approx reciprocal (cuts heavy EUP transcendentals from 3 to 2).
        sig = jnp.where(x >= 0.0, 1.0, z) * pl.reciprocal(1.0 + z, approx=True)
        pt = jnp.where(t >= 0.5, sig, 1.0 - sig)
    else:
        pt = jnp.exp(-bce)
    w = 1.0 - pt

    gi = int(gamma)
    if float(gamma) == float(gi) and 0 <= gi <= 8:
        if gi == 0:
            focal = bce
        else:
            wg = w
            for _ in range(gi - 1):   # default gamma=2 -> one multiply
                wg = wg * w
            focal = wg * bce
    else:
        # General float gamma: clamp base to avoid NaN if pt rounds above 1.
        focal = jnp.maximum(w, 0.0) ** gamma * bce

    if valid is not None:
        # Keep this a select (NOT multiply-by-mask): over-read garbage in the
        # partial last block must not propagate NaN/Inf.
        focal = jnp.where(valid, focal, 0.0)

    rows = focal.shape[0]
    # Sum over the leading reshaped axis: pure vreg-wise VPU adds.
    return jnp.sum(focal.reshape(rows // _SUBLANES, _SUBLANES, _LANES), axis=0)


def _focal_kernel(x_ref, t_ref, o_ref, *, gamma, n_elem, block_rows, sub_rows,
                  num_blocks, needs_mask, binary_targets):
    i = pl.program_id(0)
    n_sub = block_rows // sub_rows
    zero = jnp.zeros((_SUBLANES, _LANES), jnp.float32)

    def _load(s):
        r0 = pl.multiple_of(s * sub_rows, sub_rows)
        x = x_ref[pl.ds(r0, sub_rows), :].astype(jnp.float32)
        t = t_ref[pl.ds(r0, sub_rows), :].astype(jnp.float32)
        return r0, x, t

    def unmasked_body(s, acc):
        _, x, t = _load(s)
        return acc + _focal_partial(x, t, gamma=gamma,
                                    binary_targets=binary_targets, valid=None)

    def masked_body(s, acc):
        r0, x, t = _load(s)
        # Global element index of each slot (int32; wrapper asserts n_elem < 2^31).
        row = lax.broadcasted_iota(jnp.int32, x.shape, 0) + (i * block_rows + r0)
        lane = lax.broadcasted_iota(jnp.int32, x.shape, 1)
        valid = row * _LANES + lane < n_elem
        return acc + _focal_partial(x, t, gamma=gamma,
                                    binary_targets=binary_targets, valid=valid)

    if not needs_mask:
        # Coverage exactly equals n_elem: no mask work anywhere.
        o_ref[...] = lax.fori_loop(0, n_sub, unmasked_body, zero)
    elif num_blocks == 1:
        o_ref[...] = lax.fori_loop(0, n_sub, masked_body, zero)
    else:
        # Only the last block carries the tail-mask arithmetic.
        @pl.when(i < num_blocks - 1)
        def _():
            o_ref[...] = lax.fori_loop(0, n_sub, unmasked_body, zero)

        @pl.when(i == num_blocks - 1)
        def _():
            o_ref[...] = lax.fori_loop(0, n_sub, masked_body, zero)


def _choose_block_rows(rows):
    """Pick the per-step row-block: big enough to amortize pipeline overhead,
    multiple of the sub-slab / sublane tile, and aiming for >= 2 blocks so the
    parallel grid axis can feed both v7x TensorCores."""
    if rows <= 2 * _ROW_MULT:
        return rows                                  # one small full-extent block
    half = -(-rows // 2)
    block = -(-half // _ROW_MULT) * _ROW_MULT        # round up to sublane multiple
    if block > _SUB_ROWS:
        block = -(-block // _SUB_ROWS) * _SUB_ROWS   # divisible by the sub-slab
    return min(block, _MAX_BLOCK_ROWS)


def focal_loss(inputs, targets, alpha=1.0, gamma=2.0, reduction="mean",
               binary_targets=False):
    """Focal loss over arbitrary-shaped logits/targets. Returns an f32 scalar.

    Set binary_targets=True only if targets are exactly 0/1 (enables the
    cheaper sigmoid-based pt path; soft targets must use the default)."""
    assert inputs.shape == targets.shape
    n_elem = inputs.size
    chunk = _SUBLANES * _LANES
    assert 0 < n_elem < 2**31 - chunk, "int32 index math limits inputs to < 2^31 elements"

    # Flatten; no dtype cast here (cast happens in-kernel, keeping the HBM
    # streams in their native dtype).
    x = jnp.ravel(inputs)
    t = jnp.ravel(targets)

    # Minimal padding only: to a multiple of 8*128 so the (rows, 128) view and
    # the (8,128)-slab reduction are legal.  NOT padded to the block size.
    pad = (-n_elem) % chunk
    if pad:
        x = jnp.pad(x, (0, pad))
        t = jnp.pad(t, (0, pad))
    rows = (n_elem + pad) // _LANES

    block_rows = _choose_block_rows(rows)
    sub_rows = min(_SUB_ROWS, block_rows)
    num_blocks = pl.cdiv(rows, block_rows)
    needs_mask = num_blocks * block_rows * _LANES != n_elem

    x2 = x.reshape(rows, _LANES)
    t2 = t.reshape(rows, _LANES)

    kernel = functools.partial(
        _focal_kernel,
        gamma=float(gamma),
        n_elem=int(n_elem),
        block_rows=int(block_rows),
        sub_rows=int(sub_rows),
        num_blocks=int(num_blocks),
        needs_mask=bool(needs_mask),
        binary_targets=bool(binary_targets),
    )

    # VMEM budget: 2 inputs x 2 pipeline buffers x tile, plus compute headroom.
    in_block_bytes = block_rows * _LANES * (x2.dtype.itemsize + t2.dtype.itemsize)
    vmem_limit = int(min(2 * in_block_bytes + (12 << 20), 64 << 20))

    bytes_accessed = int(x2.size * x2.dtype.itemsize + t2.size * t2.dtype.itemsize
                         + num_blocks * _SUBLANES * _LANES * 4)
    transcendentals = int((2 if binary_targets else 3) * n_elem)

    in_spec = pl.BlockSpec((block_rows, _LANES), lambda i: (i, 0))
    out_spec = pl.BlockSpec((_SUBLANES, _LANES), lambda i: (i, 0))

    partials = pl.pallas_call(
        kernel,
        out_shape=jax.ShapeDtypeStruct((num_blocks * _SUBLANES, _LANES), jnp.float32),
        grid_spec=pltpu.PrefetchScalarGridSpec(
            num_scalar_prefetch=0,
            grid=(num_blocks,),
            in_specs=[in_spec, in_spec],
            out_specs=out_spec,
        ),
        compiler_params=pltpu.CompilerParams(
            dimension_semantics=("parallel",),
            vmem_limit_bytes=vmem_limit,
        ),
        cost_estimate=pl.CostEstimate(
            flops=10 * int(n_elem),
            transcendentals=transcendentals,
            bytes_accessed=bytes_accessed,
        ),
    )(x2, t2)

    # alpha folded into the tiny scalar epilogue (saves one VPU mul / element).
    total = jnp.float32(alpha) * jnp.sum(partials)
    if reduction == "mean":
        return total / jnp.float32(n_elem)
    return total


def _focal_loss_ref(inputs, targets, alpha=1.0, gamma=2.0, reduction="mean"):
    x = inputs.astype(jnp.float32)
    t = targets.astype(jnp.float32)
    bce = jnp.maximum(x, 0.0) - x * t + jnp.log1p(jnp.exp(-jnp.abs(x)))
    pt = jnp.exp(-bce)
    fl = alpha * (1.0 - pt) ** gamma * bce
    return jnp.mean(fl) if reduction == "mean" else jnp.sum(fl)


if __name__ == "__main__":
    key = jax.random.PRNGKey(0)
    k1, k2 = jax.random.split(key)

    # Small NCHW-shaped logits and binary targets (segmentation-head style).
    x = jax.random.normal(k1, (2, 4, 16, 16), dtype=jnp.float32)
    t = (jax.random.uniform(k2, (2, 4, 16, 16)) > 0.5).astype(jnp.float32)

    loss = jax.block_until_ready(focal_loss(x, t, alpha=1.0, gamma=2.0, reduction="mean"))
    ref = _focal_loss_ref(x, t, alpha=1.0, gamma=2.0, reduction="mean")
    assert jnp.allclose(loss, ref, atol=1e-5, rtol=1e-5), (loss, ref)

    # 'sum' reduction on a ragged (non-multiple-of-1024) size -> exercises the
    # minimal-pad + masked-last-block path.
    loss_s = jax.block_until_ready(focal_loss(x[:, :, :, :7], t[:, :, :, :7],
                                              alpha=1.0, gamma=2.0, reduction="sum"))
    ref_s = _focal_loss_ref(x[:, :, :, :7], t[:, :, :, :7],
                            alpha=1.0, gamma=2.0, reduction="sum")
    assert jnp.allclose(loss_s, ref_s, atol=1e-4, rtol=1e-5), (loss_s, ref_s)

    # Binary-targets fast path (approx-reciprocal sigmoid) -> looser tolerance.
    loss_b = jax.block_until_ready(focal_loss(x, t, alpha=1.0, gamma=2.0,
                                              reduction="mean", binary_targets=True))
    assert jnp.allclose(loss_b, ref, atol=5e-4, rtol=5e-3), (loss_b, ref)

    print("KERNEL_OK")
</pallas_src>

<mosaic_0001>
module attributes {stable_mosaic.version = 11 : i64} {
  func.func @_focal_kernel(%arg0: i32, %arg1: memref<16x128xf32, #tpu.memory_space<vmem>>, %arg2: memref<16x128xf32, #tpu.memory_space<vmem>>, %arg3: memref<8x128xf32, #tpu.memory_space<vmem>>) attributes {dimension_semantics = [#tpu.dimension_semantics<parallel>], iteration_bounds = array<i64: 1>, scalar_prefetch = 0 : i64, scratch_operands = 0 : i64, tpu.core_type = #tpu.core_type<tc>, window_params = [{transform_indices = @transform_0, window_bounds = array<i64: 16, 128>}, {transform_indices = @transform_1, window_bounds = array<i64: 16, 128>}, {transform_indices = @transform_2, window_bounds = array<i64: 8, 128>}]} {
    %cst = arith.constant 0.000000e+00 : f32
    %0 = vector.broadcast %cst : f32 to vector<8x128xf32>
    %c0_i32 = arith.constant 0 : i32
    %c16_i32 = arith.constant 16 : i32
    %1 = arith.muli %c0_i32, %c16_i32 : i32
    %2 = tpu.assume_multiple %1, 16 : i32
    %3 = arith.index_cast %2 : i32 to index
    %c0 = arith.constant 0 : index
    %4 = vector.load %arg1[%3, %c0] : memref<16x128xf32, #tpu.memory_space<vmem>>, vector<16x128xf32>
    %5 = arith.index_cast %2 : i32 to index
    %c0_0 = arith.constant 0 : index
    %6 = vector.load %arg2[%5, %c0_0] : memref<16x128xf32, #tpu.memory_space<vmem>>, vector<16x128xf32>
    %7 = math.absf %4 : vector<16x128xf32>
    %cst_1 = arith.constant 0.000000e+00 : f32
    %8 = vector.broadcast %cst_1 : f32 to vector<16x128xf32>
    %9 = arith.subf %8, %7 : vector<16x128xf32>
    %10 = math.exp %9 : vector<16x128xf32>
    %cst_2 = arith.constant 0.000000e+00 : f32
    %11 = vector.broadcast %cst_2 : f32 to vector<16x128xf32>
    %12 = arith.maximumf %4, %11 : vector<16x128xf32>
    %13 = arith.mulf %4, %6 : vector<16x128xf32>
    %14 = arith.subf %12, %13 : vector<16x128xf32>
    %15 = math.log1p %10 : vector<16x128xf32>
    %16 = arith.addf %14, %15 : vector<16x128xf32>
    %cst_3 = arith.constant 0.000000e+00 : f32
    %17 = vector.broadcast %cst_3 : f32 to vector<16x128xf32>
    %18 = arith.subf %17, %16 : vector<16x128xf32>
    %19 = math.exp %18 : vector<16x128xf32>
    %cst_4 = arith.constant 1.000000e+00 : f32
    %20 = vector.broadcast %cst_4 : f32 to vector<16x128xf32>
    %21 = arith.subf %20, %19 : vector<16x128xf32>
    %22 = arith.mulf %21, %21 : vector<16x128xf32>
    %23 = arith.mulf %22, %16 : vector<16x128xf32>
    %24 = vector.shape_cast %23 : vector<16x128xf32> to vector<2x8x128xf32>
    %cst_5 = arith.constant dense<0.000000e+00> : vector<8x128xf32>
    %25 = vector.multi_reduction <add>, %24, %cst_5 [0] : vector<2x8x128xf32> to vector<8x128xf32>
    %26 = arith.addf %0, %25 : vector<8x128xf32>
    %c1_i32 = arith.constant 1 : i32
    %c0_6 = arith.constant 0 : index
    %c0_7 = arith.constant 0 : index
    %27 = vector.load %arg3[%c0_6, %c0_7] : memref<8x128xf32, #tpu.memory_space<vmem>>, vector<8x128xf32>
    tpu.vector_store %arg3[%c0_6, %c0_7], %26 {strides = array<i32>} : memref<8x128xf32, #tpu.memory_space<vmem>>, vector<8x128xf32>,
    return
  }
  func.func @transform_0(%arg0: i32) -> (i32, i32) {
    %c0_i32 = arith.constant 0 : i32
    %c0_i32_0 = arith.constant 0 : i32
    return %arg0, %c0_i32 : i32, i32
  }
  func.func @transform_1(%arg0: i32) -> (i32, i32) {
    %c0_i32 = arith.constant 0 : i32
    %c0_i32_0 = arith.constant 0 : i32
    return %arg0, %c0_i32 : i32, i32
  }
  func.func @transform_2(%arg0: i32) -> (i32, i32) {
    %c0_i32 = arith.constant 0 : i32
    %c0_i32_0 = arith.constant 0 : i32
    return %arg0, %c0_i32 : i32, i32
  }
}

</mosaic_0001>

<llo_original>
// kernel: tpu_custom_call.1
$region0: #{tpu_custom_call.1}
  #allocation0 [shape = 'u32[]', space=smem, size = 0x4, offset = 0x4, fixed_abs, tag = 'smem constant byte address 0x4 - core index']
  #allocation1 [shape = 'u32[144,128]{1,0:T(1,128)}', space=vmem, size = 0x12000, scoped, tag = 'internal scratch']
  %s0 = inlined_call_operand.hbm [shape: f32[16,128], index: 0, kind: input, shape index: {}]
  %s1 = inlined_call_operand.hbm [shape: f32[16,128], index: 1, kind: input, shape index: {}]
  %s2 = inlined_call_operand.hbm [shape: f32[8,128], index: 2, kind: output, shape index: {}]
  %s3 = sld [smem:[#allocation0]]
  $region26: #{tpu_custom_call.1} parent=0
    _
  %s5 = ssub.s32 1, %s3
  %s6 = scalar_select 0, %s5, %s3
  $region1: #{tpu_custom_call.1} parent=0
    #allocation2 [shape = 'u8[8192]{0}', space=vmem, size = 0x2000, scoped, tag = 'input window, operand 0, single buffered']
    #allocation3 [shape = 's32[1]{0}', space=sflag, size = 0x4, scoped, tag = 'scoped memory for tpu_custom_call.1']
    #allocation4 [shape = 's32[1]{0}', space=sflag, size = 0x4, scoped, tag = 'scoped memory for tpu_custom_call.1']
    #allocation5 [shape = 'u8[8192]{0}', space=vmem, size = 0x2000, scoped, tag = 'input window, operand 1, single buffered']
    #allocation6 [shape = 's32[1]{0}', space=sflag, size = 0x4, scoped, tag = 'scoped memory for tpu_custom_call.1']
    #allocation7 [shape = 'u8[4096]{0}', space=vmem, size = 0x1000, scoped, tag = 'output window, operand 0, single buffered']
    %7 = vsyncpa [#allocation3], 0
    %8 = vsyncpa [#allocation6], 0
    %9 = vsyncpa [#allocation4], 0
    // Predicated region
    $region2: #{tpu_custom_call.1} parent=1 // pred_check
      _
    $region3: #{tpu_custom_call.1} parent=1 // pred_check_branch
      %11 = sbr.rel (0) target = $region5
    $region4: #{tpu_custom_call.1} parent=1 // pred_region
      %s13 = ssub.s32 256, 256
      %14 = vsyncadd [#allocation3], %s13
      %s15 = sshll.u32 [#allocation2], 4
      %s16 = int_to_ptr.vmem [resolvable:$true] %s15
      %21 = dma.hbm_to_vmem [thread:$0]  %s0, 256, %s16, [#allocation3], 128, 128, 8
    $region5: #{tpu_custom_call.1} parent=1 // pred_fallthru
      _
    // Predicated region
    $region6: #{tpu_custom_call.1} parent=1 // pred_check
      _
    $region7: #{tpu_custom_call.1} parent=1 // pred_check_branch
      %23 = sbr.rel (0) target = $region9
    $region8: #{tpu_custom_call.1} parent=1 // pred_region
      %s25 = ssub.s32 256, 256
      %26 = vsyncadd [#allocation6], %s25
      %s27 = sshll.u32 [#allocation5], 4
      %s28 = int_to_ptr.vmem [resolvable:$true] %s27
      %33 = dma.hbm_to_vmem [thread:$0]  %s1, 256, %s28, [#allocation6], 128, 128, 8
    $region9: #{tpu_custom_call.1} parent=1 // pred_fallthru
      _
    // Predicated region
    $region10: #{tpu_custom_call.1} parent=1 // pred_check
      _
    $region11: #{tpu_custom_call.1} parent=1 // pred_check_branch
      %35 = sbr.rel (0) target = $region13
    $region12: #{tpu_custom_call.1} parent=1 // pred_region
      %36 = dma.done [#allocation3], 256
    $region13: #{tpu_custom_call.1} parent=1 // pred_fallthru
      _
    // Predicated region
    $region14: #{tpu_custom_call.1} parent=1 // pred_check
      _
    $region15: #{tpu_custom_call.1} parent=1 // pred_check_branch
      %38 = sbr.rel (0) target = $region17
    $region16: #{tpu_custom_call.1} parent=1 // pred_region
      %39 = dma.done [#allocation6], 256
    $region17: #{tpu_custom_call.1} parent=1 // pred_fallthru
      _
    %v40 = vld [vmem:[#allocation2] sm:$0xff]
    %v41 = vld [vmem:[#allocation2 + $0x8] sm:$0xff]
    %v42 = vld [vmem:[#allocation5] sm:$0xff]
    %v43 = vld [vmem:[#allocation5 + $0x8] sm:$0xff]
    %v44 = vand.u32 2147483647, %v40
    %v45 = vand.u32 2147483647, %v41
    %v46 = vsub.f32 0.0, %v44
    %v47 = vsub.f32 0.0, %v45
    %v48 = vmul.f32 %v46, 1.442695
    %v49 = vpow.pop %v48
    %v50 = vmul.f32 %v47, 1.442695
    %v51 = vpow.pop %v50
    %v52 = vmax.f32 %v40, 0.0
    %v53 = vmax.f32 %v41, 0.0
    %v54 = vmul.f32 %v40, %v42
    %v55 = vmul.f32 %v41, %v43
    %v56 = vsub.f32 %v52, %v54
    %v57 = vsub.f32 %v53, %v55
    %v58 = vadd.f32 %v49, 1.0
    %v59 = vlog2.pop %v58
    %v60 = vmul.f32 %v59, 0.6931472
    %v61 = vmul.f32 -0.5, %v49
    %v62 = vadd.f32 %v61, 1.0
    %v63 = vmul.f32 %v62, %v49
    %v64 = vand.u32 2147483647, %v49
    %vm65 = vcmp.lt.f32.partialorder %v64, 0.0004427343
    %v66 = vsel %vm65, %v63, %v60
    %v67 = vadd.f32 %v51, 1.0
    %v68 = vlog2.pop %v67
    %v69 = vmul.f32 %v68, 0.6931472
    %v70 = vmul.f32 -0.5, %v51
    %v71 = vadd.f32 %v70, 1.0
    %v72 = vmul.f32 %v71, %v51
    %v73 = vand.u32 2147483647, %v51
    %vm74 = vcmp.lt.f32.partialorder %v73, 0.0004427343
    %v75 = vsel %vm74, %v72, %v69
    %v76 = vadd.f32 %v56, %v66
    %v77 = vadd.f32 %v57, %v75
    %v78 = vsub.f32 0.0, %v76
    %v79 = vsub.f32 0.0, %v77
    %v80 = vmul.f32 %v78, 1.442695
    %v81 = vpow.pop %v80
    %v82 = vmul.f32 %v79, 1.442695
    %v83 = vpow.pop %v82
    %v84 = vsub.f32 1.0, %v81
    %v85 = vsub.f32 1.0, %v83
    %v86 = vmul.f32 %v84, %v84
    %v87 = vmul.f32 %v85, %v85
    %v88 = vmul.f32 %v86, %v76
    %v89 = vmul.f32 %v87, %v77
    %v90 = vadd.f32 %v88, %v89
    %v91 = vadd.f32 %v90, 0.0
    %92 = vst [vmem:[#allocation7] sm:$0xff] %v91
    // Predicated region
    $region18: #{tpu_custom_call.1} parent=1 // pred_check
      _
    $region19: #{tpu_custom_call.1} parent=1 // pred_check_branch
      %94 = sbr.rel (0) target = $region21
    $region20: #{tpu_custom_call.1} parent=1 // pred_region
      %s96 = ssub.s32 128, 128
      %97 = vsyncadd [#allocation4], %s96
      %s99 = sshll.u32 [#allocation7], 4
      %s100 = int_to_ptr.vmem [resolvable:$true] %s99
      %102 = dma.vmem_to_hbm [thread:$0]  %s100, 128, %s2, [#allocation4]
    $region21: #{tpu_custom_call.1} parent=1 // pred_fallthru
      _
    // Predicated region
    $region22: #{tpu_custom_call.1} parent=1 // pred_check
      _
    $region23: #{tpu_custom_call.1} parent=1 // pred_check_branch
      %104 = sbr.rel (0) target = $region25
    $region24: #{tpu_custom_call.1} parent=1 // pred_region
      %105 = dma.done [#allocation4], 128
    $region25: #{tpu_custom_call.1} parent=1 // pred_fallthru
      _
    %106 = vsyncpa [#allocation3], 1
    %107 = vsyncpa [#allocation6], 1
    %108 = vsyncpa [#allocation4], 1

</llo_original>
